<compile_context>
chip_gen: v5e
topology: v5e:2x2
jax: 0.10.0
libtpu: 0.0.40
codegen_flags: <defaults>
</compile_context>

<pallas_src>
import jax
import jax.numpy as jnp
from jax.experimental import pallas as pl
from jax.experimental.pallas import tpu as pltpu


def _make_ordinal_kernel(value_segments, total_lanes, tile_l, tiles_per_slab,
                         needs_mask):
    """Builds the per-tile kernel. All config is static / closed over."""

    def kernel(p_ref, t_ref, s1_ref, s0_ref, c_ref):
        # p_ref : (N, 2K, TL) interleaved [class0, class1] logits per segment
        # t_ref : (N, TL)     real-valued regression targets
        # s1_ref: (1, N, K)   sum of CE(label=1) over pixels with target >  seg
        # s0_ref: (1, N, K)   sum of CE(label=0) over pixels with target <= seg
        # c_ref : (1, N, K)   count of pixels with target > seg
        @pl.when(pl.program_id(1) == 0)
        def _init():
            s1_ref[...] = jnp.zeros_like(s1_ref)
            s0_ref[...] = jnp.zeros_like(s0_ref)
            c_ref[...] = jnp.zeros_like(c_ref)

        t = t_ref[...].astype(jnp.float32)                      # (N, TL)

        if needs_mask:
            # Mask lanes past the end of the pixel axis (the last tile of a
            # slab may hang over the edge); replaces any jnp.pad copies.
            tile_idx = pl.program_id(0) * tiles_per_slab + pl.program_id(1)
            lane = jax.lax.broadcasted_iota(jnp.int32, (1, t.shape[-1]), 1)
            valid = (tile_idx * tile_l + lane) < total_lanes    # (1, TL)
        else:
            valid = None

        # Static unroll over the (few) ordinal segments.
        for i, seg in enumerate(value_segments):
            pe = p_ref[:, 2 * i, :].astype(jnp.float32)      # class-0 logits
            po = p_ref[:, 2 * i + 1, :].astype(jnp.float32)  # class-1 logits
            d = pe - po
            # -log softmax[1] = softplus(pe - po); -log softmax[0] = that - d.
            # Stable softplus: one exp + one log per logit pair (EUP floor).
            sp = jnp.maximum(d, 0.0) + jnp.log(1.0 + jnp.exp(-jnp.abs(d)))
            ce1 = sp
            ce0 = sp - d

            # NOTE: targets are assumed finite real values (NaN handling in
            # the literal, non-runnable PyTorch reference is ill-defined).
            cmp_lt = t > seg
            if valid is None:
                mask_lt = cmp_lt
                mask_gt = jnp.logical_not(cmp_lt)
            else:
                mask_lt = jnp.logical_and(valid, cmp_lt)
                mask_gt = jnp.logical_and(valid, jnp.logical_not(cmp_lt))

            # Lane-axis reductions only; accumulate into the VMEM-resident
            # output block (written back to HBM once per slab).
            s1_ref[0, :, i:i + 1] += jnp.sum(
                jnp.where(mask_lt, ce1, 0.0), axis=1, keepdims=True)
            s0_ref[0, :, i:i + 1] += jnp.sum(
                jnp.where(mask_gt, ce0, 0.0), axis=1, keepdims=True)
            c_ref[0, :, i:i + 1] += jnp.sum(
                mask_lt.astype(jnp.float32), axis=1, keepdims=True)

    return kernel


def ordinal_regression_loss_pallas(pred, target, value_segments,
                                   loss_weight=1.0, tile_l=32768):
    """pred: (N, C, H, W) with C % (2K) == 0 (first 2K channels used);
    target: (N, H, W) real-valued regression targets."""
    N, C, H, W = pred.shape
    K = len(value_segments)
    num_pieces = 2 * K
    if (C // num_pieces) * num_pieces != C:
        raise ValueError(
            f"invalid prediction shape {pred.shape}, dim-1 should be "
            f"divisible by {num_pieces}")

    L = H * W
    # Free, layout-preserving views: NCHW -> (N, 2K, L) keeps pixels on the
    # fast last axis (=> lanes inside the kernel) and the 2K channels on
    # sublanes.  No transpose / de-interleave / pad / dtype cast here.
    # (The channel slice is an identity when C == 2K, the normal DORN setup.)
    pred3 = pred[:, :num_pieces, :, :].reshape(N, num_pieces, L)
    tgt2 = target.reshape(N, L)

    # Lane-tile selection: as large as possible (amortizes the ~0.35us
    # per-grid-step overhead) while keeping the double-buffered input working
    # set under ~8 MiB, comfortably inside the default scoped VMEM on
    # v5e (16 MiB) / v6e (32 MiB) / v7x (32 MiB).
    bytes_per_lane = N * (num_pieces * pred.dtype.itemsize
                          + target.dtype.itemsize)
    budget_single_buffer = 4 * 1024 * 1024     # x2 for BlockSpec double-buffer
    cap = max(128, (budget_single_buffer // bytes_per_lane) // 128 * 128)
    tl = min(max(128, (tile_l // 128) * 128), cap)
    TL = L if L <= tl else tl

    n_tiles = pl.cdiv(L, TL)
    # Leading "parallel" axis: each of v7x's two TensorCores owns half of the
    # pixel tiles (harmless serial outer loop on single-core v5e/v6e).
    num_slabs = 2 if n_tiles >= 2 else 1
    tiles_per_slab = pl.cdiv(n_tiles, num_slabs)
    needs_mask = (num_slabs * tiles_per_slab * TL != L)

    kernel = _make_ordinal_kernel(
        tuple(float(s) for s in value_segments), L, TL, tiles_per_slab,
        needs_mask)

    def in_tile(c, j):
        # Clamp so an over-hanging tile of the last slab never DMAs out of
        # bounds; its lanes are fully masked off inside the kernel.
        return jnp.minimum(c * tiles_per_slab + j, n_tiles - 1)

    out_sd = jax.ShapeDtypeStruct((num_slabs, N, K), jnp.float32)
    out_spec = pl.BlockSpec((1, N, K), lambda c, j: (c, 0, 0))
    acc_s1, acc_s0, acc_c = pl.pallas_call(
        kernel,
        out_shape=(out_sd, out_sd, out_sd),
        grid=(num_slabs, tiles_per_slab),
        in_specs=[
            pl.BlockSpec((N, num_pieces, TL),
                         lambda c, j: (0, 0, in_tile(c, j))),
            pl.BlockSpec((N, TL),
                         lambda c, j: (0, in_tile(c, j))),
        ],
        out_specs=(out_spec, out_spec, out_spec),
        compiler_params=pltpu.CompilerParams(
            dimension_semantics=("parallel", "arbitrary")),
    )(pred3, tgt2)

    # Tiny final combine in plain JAX.
    s_lt = jnp.sum(acc_s1, axis=(0, 1))           # (K,)
    s_gt = jnp.sum(acc_s0, axis=(0, 1))           # (K,)
    c_lt = jnp.sum(acc_c, axis=(0, 1))            # (K,) count of target > seg
    total = jnp.float32(N * L)
    c_gt = total - c_lt                           # reference uses sizes here
    # F.cross_entropy(reduction='mean', ignore_index=-100) == sum / count; the
    # reference then divides again by (count + 1) and sums over segments.
    # (No guard for count == 0: the PyTorch reference also yields NaN there.)
    loss_per_seg = (s_lt / c_lt) / (c_lt + 1.0) + (s_gt / c_gt) / (c_gt + 1.0)
    return loss_weight * jnp.sum(loss_per_seg)


class OrdinalRegressionLoss:
    """JAX/Pallas counterpart of the PyTorch OrdinalRegressionLoss module."""

    def __init__(self, K, max_value=1.0, loss_weight=1.0):
        assert K > 1, f"invalid value K: {K}"
        self.loss_weight = float(loss_weight)
        step_val = max_value / K
        self.value_segments = [x * step_val for x in range(K)]

    def __call__(self, pred, target, weight=None, **kwargs):
        # weight handling in @weighted_loss is identity for weight=None on a
        # scalar loss, which is the only well-defined path here.
        return ordinal_regression_loss_pallas(
            pred, target, self.value_segments, self.loss_weight)


def _reference_loss(pred, target, value_segments, loss_weight):
    """Pure-JAX reference (no Pallas) for correctness checking."""
    N, _, H, W = pred.shape
    total = float(N * H * W)
    loss = jnp.float32(0.0)
    for i, k in enumerate(value_segments):
        logits = pred[:, 2 * i:2 * i + 2].astype(jnp.float32)  # (N,2,H,W)
        lse = jax.nn.logsumexp(logits, axis=1)
        ce1 = lse - logits[:, 1]
        ce0 = lse - logits[:, 0]
        mask_lt = target > k
        mask_gt = target <= k
        c_lt = jnp.sum(mask_lt).astype(jnp.float32)
        c_gt = total - c_lt
        loss += (jnp.sum(jnp.where(mask_lt, ce1, 0.0)) / c_lt) / (c_lt + 1.0)
        loss += (jnp.sum(jnp.where(mask_gt, ce0, 0.0)) / c_gt) / (c_gt + 1.0)
    return loss_weight * loss


if __name__ == "__main__":
    key = jax.random.PRNGKey(0)
    k_pred1, k_tgt1, k_pred2, k_tgt2 = jax.random.split(key, 4)

    K = 2                       # -> value_segments = [0.0, 0.5]
    loss_mod = OrdinalRegressionLoss(K=K, max_value=1.0, loss_weight=1.0)

    # Case 1: canonical small DORN shape; single lane tile (TL == H*W).
    N, C, H, W = 2, 2 * K, 16, 16
    pred = jax.random.normal(k_pred1, (N, C, H, W), dtype=jnp.float32)
    # Targets in [-0.25, 1.0) so every threshold has samples on both sides.
    target = jax.random.uniform(k_tgt1, (N, H, W), dtype=jnp.float32,
                                minval=-0.25, maxval=1.0)
    loss = jax.block_until_ready(loss_mod(pred, target))
    ref = _reference_loss(pred, target, loss_mod.value_segments,
                          loss_mod.loss_weight)
    assert jnp.isfinite(loss), f"non-finite loss: {loss}"
    assert jnp.allclose(loss, ref, rtol=5e-5, atol=1e-6), (loss, ref)

    # Case 2: spatial size that is not a multiple of the lane tile, with a
    # small tile -> exercises the multi-tile grid, the two-slab parallel axis
    # and the in-kernel tail masking.
    H2 = W2 = 20
    pred2 = jax.random.normal(k_pred2, (N, C, H2, W2), dtype=jnp.float32)
    target2 = jax.random.uniform(k_tgt2, (N, H2, W2), dtype=jnp.float32,
                                 minval=-0.25, maxval=1.0)
    loss2 = jax.block_until_ready(
        ordinal_regression_loss_pallas(pred2, target2,
                                       loss_mod.value_segments,
                                       loss_weight=1.0, tile_l=128))
    ref2 = _reference_loss(pred2, target2, loss_mod.value_segments, 1.0)
    assert jnp.isfinite(loss2), f"non-finite loss: {loss2}"
    assert jnp.allclose(loss2, ref2, rtol=5e-5, atol=1e-6), (loss2, ref2)

    print("KERNEL_OK")
</pallas_src>

<mosaic_0001>
module attributes {stable_mosaic.version = 11 : i64} {
  func.func @kernel(%arg0: i32, %arg1: i32, %arg2: memref<2x4x256xf32, #tpu.memory_space<vmem>>, %arg3: memref<2x256xf32, #tpu.memory_space<vmem>>, %arg4: memref<1x2x2xf32, #tpu.memory_space<vmem>>, %arg5: memref<1x2x2xf32, #tpu.memory_space<vmem>>, %arg6: memref<1x2x2xf32, #tpu.memory_space<vmem>>) attributes {dimension_semantics = [#tpu.dimension_semantics<parallel>, #tpu.dimension_semantics<arbitrary>], iteration_bounds = array<i64: 1, 1>, scalar_prefetch = 0 : i64, scratch_operands = 0 : i64, tpu.core_type = #tpu.core_type<tc>, window_params = [{transform_indices = @transform_0, window_bounds = array<i64: 2, 4, 256>}, {transform_indices = @transform_1, window_bounds = array<i64: 2, 256>}, {transform_indices = @transform_2, window_bounds = array<i64: 1, 2, 2>}, {transform_indices = @transform_3, window_bounds = array<i64: 1, 2, 2>}, {transform_indices = @transform_4, window_bounds = array<i64: 1, 2, 2>}]} {
    %c0_i32 = arith.constant 0 : i32
    %0 = arith.cmpi eq, %arg1, %c0_i32 : i32
    %1 = arith.extui %0 : i1 to i32
    %c0_i32_0 = arith.constant 0 : i32
    %2 = arith.cmpi ne, %1, %c0_i32_0 : i32
    scf.if %2 {
      %cst_66 = arith.constant 0.000000e+00 : f32
      %102 = vector.broadcast %cst_66 : f32 to vector<1x2x2xf32>
      %c0_67 = arith.constant 0 : index
      %c0_68 = arith.constant 0 : index
      %c0_69 = arith.constant 0 : index
      %103 = vector.load %arg4[%c0_67, %c0_68, %c0_69] : memref<1x2x2xf32, #tpu.memory_space<vmem>>, vector<1x2x2xf32>
      tpu.vector_store %arg4[%c0_67, %c0_68, %c0_69], %102 {strides = array<i32>} : memref<1x2x2xf32, #tpu.memory_space<vmem>>, vector<1x2x2xf32>,
      %cst_70 = arith.constant 0.000000e+00 : f32
      %104 = vector.broadcast %cst_70 : f32 to vector<1x2x2xf32>
      %c0_71 = arith.constant 0 : index
      %c0_72 = arith.constant 0 : index
      %c0_73 = arith.constant 0 : index
      %105 = vector.load %arg5[%c0_71, %c0_72, %c0_73] : memref<1x2x2xf32, #tpu.memory_space<vmem>>, vector<1x2x2xf32>
      tpu.vector_store %arg5[%c0_71, %c0_72, %c0_73], %104 {strides = array<i32>} : memref<1x2x2xf32, #tpu.memory_space<vmem>>, vector<1x2x2xf32>,
      %cst_74 = arith.constant 0.000000e+00 : f32
      %106 = vector.broadcast %cst_74 : f32 to vector<1x2x2xf32>
      %c0_75 = arith.constant 0 : index
      %c0_76 = arith.constant 0 : index
      %c0_77 = arith.constant 0 : index
      %107 = vector.load %arg6[%c0_75, %c0_76, %c0_77] : memref<1x2x2xf32, #tpu.memory_space<vmem>>, vector<1x2x2xf32>
      tpu.vector_store %arg6[%c0_75, %c0_76, %c0_77], %106 {strides = array<i32>} : memref<1x2x2xf32, #tpu.memory_space<vmem>>, vector<1x2x2xf32>,
    } else {
    }
    %c0 = arith.constant 0 : index
    %c0_1 = arith.constant 0 : index
    %3 = vector.load %arg3[%c0, %c0_1] : memref<2x256xf32, #tpu.memory_space<vmem>>, vector<2x256xf32>
    %c0_2 = arith.constant 0 : index
    %c0_3 = arith.constant 0 : index
    %c0_4 = arith.constant 0 : index
    %4 = vector.load %arg2[%c0_2, %c0_3, %c0_4] : memref<2x4x256xf32, #tpu.memory_space<vmem>>, vector<2x1x256xf32>
    %5 = vector.shape_cast %4 : vector<2x1x256xf32> to vector<2x256xf32>
    %c0_5 = arith.constant 0 : index
    %c1 = arith.constant 1 : index
    %c0_6 = arith.constant 0 : index
    %6 = vector.load %arg2[%c0_5, %c1, %c0_6] : memref<2x4x256xf32, #tpu.memory_space<vmem>>, vector<2x1x256xf32>
    %7 = vector.shape_cast %6 : vector<2x1x256xf32> to vector<2x256xf32>
    %8 = arith.subf %5, %7 : vector<2x256xf32>
    %cst = arith.constant 0.000000e+00 : f32
    %9 = vector.broadcast %cst : f32 to vector<2x256xf32>
    %10 = arith.maximumf %8, %9 : vector<2x256xf32>
    %11 = math.absf %8 : vector<2x256xf32>
    %cst_7 = arith.constant 0.000000e+00 : f32
    %12 = vector.broadcast %cst_7 : f32 to vector<2x256xf32>
    %13 = arith.subf %12, %11 : vector<2x256xf32>
    %14 = math.exp %13 : vector<2x256xf32>
    %cst_8 = arith.constant 1.000000e+00 : f32
    %15 = vector.broadcast %cst_8 : f32 to vector<2x256xf32>
    %16 = arith.addf %15, %14 : vector<2x256xf32>
    %17 = math.log %16 : vector<2x256xf32>
    %18 = arith.addf %10, %17 : vector<2x256xf32>
    %19 = arith.subf %18, %8 : vector<2x256xf32>
    %cst_9 = arith.constant 0.000000e+00 : f32
    %20 = vector.broadcast %cst_9 : f32 to vector<2x256xf32>
    %21 = arith.cmpf ogt, %3, %20 : vector<2x256xf32>
    %cst_10 = arith.constant dense<true> : vector<2x256xi1>
    %22 = arith.xori %21, %cst_10 : vector<2x256xi1>
    %c0_11 = arith.constant 0 : index
    %c0_12 = arith.constant 0 : index
    %c0_13 = arith.constant 0 : index
    %23 = vector.load %arg4[%c0_11, %c0_12, %c0_13] : memref<1x2x2xf32, #tpu.memory_space<vmem>>, vector<1x2x1xf32>
    %24 = vector.shape_cast %23 : vector<1x2x1xf32> to vector<2x1xf32>
    %cst_14 = arith.constant 0.000000e+00 : f32
    %25 = vector.broadcast %cst_14 : f32 to vector<2x256xf32>
    %26 = arith.select %21, %18, %25 : vector<2x256xi1>, vector<2x256xf32>
    %cst_15 = arith.constant dense<0.000000e+00> : vector<2xf32>
    %27 = vector.multi_reduction <add>, %26, %cst_15 [1] : vector<2x256xf32> to vector<2xf32>
    %28 = vector.shape_cast %27 : vector<2xf32> to vector<2x1xf32>
    %29 = arith.addf %24, %28 : vector<2x1xf32>
    %c0_16 = arith.constant 0 : index
    %c0_17 = arith.constant 0 : index
    %c0_18 = arith.constant 0 : index
    %30 = vector.load %arg4[%c0_16, %c0_17, %c0_18] : memref<1x2x2xf32, #tpu.memory_space<vmem>>, vector<1x2x1xf32>
    %31 = vector.shape_cast %30 : vector<1x2x1xf32> to vector<2x1xf32>
    %32 = vector.shape_cast %29 : vector<2x1xf32> to vector<1x2x1xf32>
    tpu.vector_store %arg4[%c0_16, %c0_17, %c0_18], %32 {strides = array<i32>} : memref<1x2x2xf32, #tpu.memory_space<vmem>>, vector<1x2x1xf32>,
    %c0_19 = arith.constant 0 : index
    %c0_20 = arith.constant 0 : index
    %c0_21 = arith.constant 0 : index
    %33 = vector.load %arg5[%c0_19, %c0_20, %c0_21] : memref<1x2x2xf32, #tpu.memory_space<vmem>>, vector<1x2x1xf32>
    %34 = vector.shape_cast %33 : vector<1x2x1xf32> to vector<2x1xf32>
    %cst_22 = arith.constant 0.000000e+00 : f32
    %35 = vector.broadcast %cst_22 : f32 to vector<2x256xf32>
    %36 = arith.select %22, %19, %35 : vector<2x256xi1>, vector<2x256xf32>
    %cst_23 = arith.constant dense<0.000000e+00> : vector<2xf32>
    %37 = vector.multi_reduction <add>, %36, %cst_23 [1] : vector<2x256xf32> to vector<2xf32>
    %38 = vector.shape_cast %37 : vector<2xf32> to vector<2x1xf32>
    %39 = arith.addf %34, %38 : vector<2x1xf32>
    %c0_24 = arith.constant 0 : index
    %c0_25 = arith.constant 0 : index
    %c0_26 = arith.constant 0 : index
    %40 = vector.load %arg5[%c0_24, %c0_25, %c0_26] : memref<1x2x2xf32, #tpu.memory_space<vmem>>, vector<1x2x1xf32>
    %41 = vector.shape_cast %40 : vector<1x2x1xf32> to vector<2x1xf32>
    %42 = vector.shape_cast %39 : vector<2x1xf32> to vector<1x2x1xf32>
    tpu.vector_store %arg5[%c0_24, %c0_25, %c0_26], %42 {strides = array<i32>} : memref<1x2x2xf32, #tpu.memory_space<vmem>>, vector<1x2x1xf32>,
    %c0_27 = arith.constant 0 : index
    %c0_28 = arith.constant 0 : index
    %c0_29 = arith.constant 0 : index
    %43 = vector.load %arg6[%c0_27, %c0_28, %c0_29] : memref<1x2x2xf32, #tpu.memory_space<vmem>>, vector<1x2x1xf32>
    %44 = vector.shape_cast %43 : vector<1x2x1xf32> to vector<2x1xf32>
    %45 = arith.extui %21 : vector<2x256xi1> to vector<2x256xi32>
    %46 = arith.sitofp %45 : vector<2x256xi32> to vector<2x256xf32>
    %cst_30 = arith.constant dense<0.000000e+00> : vector<2xf32>
    %47 = vector.multi_reduction <add>, %46, %cst_30 [1] : vector<2x256xf32> to vector<2xf32>
    %48 = vector.shape_cast %47 : vector<2xf32> to vector<2x1xf32>
    %49 = arith.addf %44, %48 : vector<2x1xf32>
    %c0_31 = arith.constant 0 : index
    %c0_32 = arith.constant 0 : index
    %c0_33 = arith.constant 0 : index
    %50 = vector.load %arg6[%c0_31, %c0_32, %c0_33] : memref<1x2x2xf32, #tpu.memory_space<vmem>>, vector<1x2x1xf32>
    %51 = vector.shape_cast %50 : vector<1x2x1xf32> to vector<2x1xf32>
    %52 = vector.shape_cast %49 : vector<2x1xf32> to vector<1x2x1xf32>
    tpu.vector_store %arg6[%c0_31, %c0_32, %c0_33], %52 {strides = array<i32>} : memref<1x2x2xf32, #tpu.memory_space<vmem>>, vector<1x2x1xf32>,
    %c0_34 = arith.constant 0 : index
    %c2 = arith.constant 2 : index
    %c0_35 = arith.constant 0 : index
    %53 = vector.load %arg2[%c0_34, %c2, %c0_35] : memref<2x4x256xf32, #tpu.memory_space<vmem>>, vector<2x1x256xf32>
    %54 = vector.shape_cast %53 : vector<2x1x256xf32> to vector<2x256xf32>
    %c0_36 = arith.constant 0 : index
    %c3 = arith.constant 3 : index
    %c0_37 = arith.constant 0 : index
    %55 = vector.load %arg2[%c0_36, %c3, %c0_37] : memref<2x4x256xf32, #tpu.memory_space<vmem>>, vector<2x1x256xf32>
    %56 = vector.shape_cast %55 : vector<2x1x256xf32> to vector<2x256xf32>
    %57 = arith.subf %54, %56 : vector<2x256xf32>
    %cst_38 = arith.constant 0.000000e+00 : f32
    %58 = vector.broadcast %cst_38 : f32 to vector<2x256xf32>
    %59 = arith.maximumf %57, %58 : vector<2x256xf32>
    %60 = math.absf %57 : vector<2x256xf32>
    %cst_39 = arith.constant 0.000000e+00 : f32
    %61 = vector.broadcast %cst_39 : f32 to vector<2x256xf32>
    %62 = arith.subf %61, %60 : vector<2x256xf32>
    %63 = math.exp %62 : vector<2x256xf32>
    %cst_40 = arith.constant 1.000000e+00 : f32
    %64 = vector.broadcast %cst_40 : f32 to vector<2x256xf32>
    %65 = arith.addf %64, %63 : vector<2x256xf32>
    %66 = math.log %65 : vector<2x256xf32>
    %67 = arith.addf %59, %66 : vector<2x256xf32>
    %68 = arith.subf %67, %57 : vector<2x256xf32>
    %cst_41 = arith.constant 5.000000e-01 : f32
    %69 = vector.broadcast %cst_41 : f32 to vector<2x256xf32>
    %70 = arith.cmpf ogt, %3, %69 : vector<2x256xf32>
    %cst_42 = arith.constant dense<true> : vector<2x256xi1>
    %71 = arith.xori %70, %cst_42 : vector<2x256xi1>
    %c0_43 = arith.constant 0 : index
    %c0_44 = arith.constant 0 : index
    %c1_45 = arith.constant 1 : index
    %72 = vector.load %arg4[%c0_43, %c0_44, %c1_45] : memref<1x2x2xf32, #tpu.memory_space<vmem>>, vector<1x2x1xf32>
    %73 = vector.shape_cast %72 : vector<1x2x1xf32> to vector<2x1xf32>
    %cst_46 = arith.constant 0.000000e+00 : f32
    %74 = vector.broadcast %cst_46 : f32 to vector<2x256xf32>
    %75 = arith.select %70, %67, %74 : vector<2x256xi1>, vector<2x256xf32>
    %cst_47 = arith.constant dense<0.000000e+00> : vector<2xf32>
    %76 = vector.multi_reduction <add>, %75, %cst_47 [1] : vector<2x256xf32> to vector<2xf32>
    %77 = vector.shape_cast %76 : vector<2xf32> to vector<2x1xf32>
    %78 = arith.addf %73, %77 : vector<2x1xf32>
    %c0_48 = arith.constant 0 : index
    %c0_49 = arith.constant 0 : index
    %c1_50 = arith.constant 1 : index
    %79 = vector.load %arg4[%c0_48, %c0_49, %c1_50] : memref<1x2x2xf32, #tpu.memory_space<vmem>>, vector<1x2x1xf32>
    %80 = vector.shape_cast %79 : vector<1x2x1xf32> to vector<2x1xf32>
    %81 = vector.shape_cast %78 : vector<2x1xf32> to vector<1x2x1xf32>
    tpu.vector_store %arg4[%c0_48, %c0_49, %c1_50], %81 {strides = array<i32>} : memref<1x2x2xf32, #tpu.memory_space<vmem>>, vector<1x2x1xf32>,
    %c0_51 = arith.constant 0 : index
    %c0_52 = arith.constant 0 : index
    %c1_53 = arith.constant 1 : index
    %82 = vector.load %arg5[%c0_51, %c0_52, %c1_53] : memref<1x2x2xf32, #tpu.memory_space<vmem>>, vector<1x2x1xf32>
    %83 = vector.shape_cast %82 : vector<1x2x1xf32> to vector<2x1xf32>
    %cst_54 = arith.constant 0.000000e+00 : f32
    %84 = vector.broadcast %cst_54 : f32 to vector<2x256xf32>
    %85 = arith.select %71, %68, %84 : vector<2x256xi1>, vector<2x256xf32>
    %cst_55 = arith.constant dense<0.000000e+00> : vector<2xf32>
    %86 = vector.multi_reduction <add>, %85, %cst_55 [1] : vector<2x256xf32> to vector<2xf32>
    %87 = vector.shape_cast %86 : vector<2xf32> to vector<2x1xf32>
    %88 = arith.addf %83, %87 : vector<2x1xf32>
    %c0_56 = arith.constant 0 : index
    %c0_57 = arith.constant 0 : index
    %c1_58 = arith.constant 1 : index
    %89 = vector.load %arg5[%c0_56, %c0_57, %c1_58] : memref<1x2x2xf32, #tpu.memory_space<vmem>>, vector<1x2x1xf32>
    %90 = vector.shape_cast %89 : vector<1x2x1xf32> to vector<2x1xf32>
    %91 = vector.shape_cast %88 : vector<2x1xf32> to vector<1x2x1xf32>
    tpu.vector_store %arg5[%c0_56, %c0_57, %c1_58], %91 {strides = array<i32>} : memref<1x2x2xf32, #tpu.memory_space<vmem>>, vector<1x2x1xf32>,
    %c0_59 = arith.constant 0 : index
    %c0_60 = arith.constant 0 : index
    %c1_61 = arith.constant 1 : index
    %92 = vector.load %arg6[%c0_59, %c0_60, %c1_61] : memref<1x2x2xf32, #tpu.memory_space<vmem>>, vector<1x2x1xf32>
    %93 = vector.shape_cast %92 : vector<1x2x1xf32> to vector<2x1xf32>
    %94 = arith.extui %70 : vector<2x256xi1> to vector<2x256xi32>
    %95 = arith.sitofp %94 : vector<2x256xi32> to vector<2x256xf32>
    %cst_62 = arith.constant dense<0.000000e+00> : vector<2xf32>
    %96 = vector.multi_reduction <add>, %95, %cst_62 [1] : vector<2x256xf32> to vector<2xf32>
    %97 = vector.shape_cast %96 : vector<2xf32> to vector<2x1xf32>
    %98 = arith.addf %93, %97 : vector<2x1xf32>
    %c0_63 = arith.constant 0 : index
    %c0_64 = arith.constant 0 : index
    %c1_65 = arith.constant 1 : index
    %99 = vector.load %arg6[%c0_63, %c0_64, %c1_65] : memref<1x2x2xf32, #tpu.memory_space<vmem>>, vector<1x2x1xf32>
    %100 = vector.shape_cast %99 : vector<1x2x1xf32> to vector<2x1xf32>
    %101 = vector.shape_cast %98 : vector<2x1xf32> to vector<1x2x1xf32>
    tpu.vector_store %arg6[%c0_63, %c0_64, %c1_65], %101 {strides = array<i32>} : memref<1x2x2xf32, #tpu.memory_space<vmem>>, vector<1x2x1xf32>,
    return
  }
  func.func @transform_0(%arg0: i32, %arg1: i32) -> (i32, i32, i32) {
    %c1_i32 = arith.constant 1 : i32
    %0 = arith.muli %arg0, %c1_i32 : i32
    %1 = arith.addi %0, %arg1 : i32
    %c0_i32 = arith.constant 0 : i32
    %2 = arith.minsi %1, %c0_i32 : i32
    %c0_i32_0 = arith.constant 0 : i32
    %c0_i32_1 = arith.constant 0 : i32
    %c0_i32_2 = arith.constant 0 : i32
    return %c0_i32_0, %c0_i32_1, %2 : i32, i32, i32
  }
  func.func @transform_1(%arg0: i32, %arg1: i32) -> (i32, i32) {
    %c1_i32 = arith.constant 1 : i32
    %0 = arith.muli %arg0, %c1_i32 : i32
    %1 = arith.addi %0, %arg1 : i32
    %c0_i32 = arith.constant 0 : i32
    %2 = arith.minsi %1, %c0_i32 : i32
    %c0_i32_0 = arith.constant 0 : i32
    %c0_i32_1 = arith.constant 0 : i32
    return %c0_i32_0, %2 : i32, i32
  }
  func.func @transform_2(%arg0: i32, %arg1: i32) -> (i32, i32, i32) {
    %c0_i32 = arith.constant 0 : i32
    %c0_i32_0 = arith.constant 0 : i32
    %c0_i32_1 = arith.constant 0 : i32
    return %arg0, %c0_i32, %c0_i32_0 : i32, i32, i32
  }
  func.func @transform_3(%arg0: i32, %arg1: i32) -> (i32, i32, i32) {
    %c0_i32 = arith.constant 0 : i32
    %c0_i32_0 = arith.constant 0 : i32
    %c0_i32_1 = arith.constant 0 : i32
    return %arg0, %c0_i32, %c0_i32_0 : i32, i32, i32
  }
  func.func @transform_4(%arg0: i32, %arg1: i32) -> (i32, i32, i32) {
    %c0_i32 = arith.constant 0 : i32
    %c0_i32_0 = arith.constant 0 : i32
    %c0_i32_1 = arith.constant 0 : i32
    return %arg0, %c0_i32, %c0_i32_0 : i32, i32, i32
  }
}

</mosaic_0001>

<llo_original>
// kernel: tpu_custom_call.1
$region0: #{tpu_custom_call.1}
  #allocation0 [shape = 'u32[]', space=smem, size = 0x4, offset = 0x4, fixed_abs, tag = 'smem constant byte address 0x4 - core index']
  #allocation1 [shape = 'u32[72,128]{1,0:T(1,128)}', space=vmem, size = 0x9000, scoped, tag = 'internal scratch']
  %s0 = inlined_call_operand.hbm [shape: f32[2,4,256], index: 0, kind: input, shape index: {}]
  %s1 = inlined_call_operand.hbm [shape: f32[2,256], index: 1, kind: input, shape index: {}]
  %s2 = inlined_call_operand.hbm [shape: f32[1,2,2], index: 2, kind: output, shape index: {0}]
  %s3 = inlined_call_operand.hbm [shape: f32[1,2,2], index: 3, kind: output, shape index: {1}]
  %s4 = inlined_call_operand.hbm [shape: f32[1,2,2], index: 4, kind: output, shape index: {2}]
  %5 = xla_tuple %s2, %s3, %s4
  %s6 = sld [smem:[#allocation0]]
  $region46: #{tpu_custom_call.1} parent=0
    _
  %s8 = ssub.s32 1, %s6
  %s9 = scalar_select 0, %s8, %s6
  $region1: #{tpu_custom_call.1} parent=0
    #allocation2 [shape = 'u8[8192]{0}', space=vmem, size = 0x2000, scoped, tag = 'input window, operand 0, single buffered']
    #allocation3 [shape = 's32[1]{0}', space=sflag, size = 0x4, scoped, tag = 'scoped memory for tpu_custom_call.1']
    #allocation4 [shape = 's32[1]{0}', space=sflag, size = 0x4, scoped, tag = 'scoped memory for tpu_custom_call.1']
    #allocation5 [shape = 'u8[2048]{0}', space=vmem, size = 0x800, scoped, tag = 'input window, operand 1, single buffered']
    #allocation6 [shape = 's32[1]{0}', space=sflag, size = 0x4, scoped, tag = 'scoped memory for tpu_custom_call.1']
    #allocation7 [shape = 'u8[1024]{0}', space=vmem, size = 0x400, scoped, tag = 'output window, operand 0, single buffered']
    #allocation8 [shape = 'u8[1024]{0}', space=vmem, size = 0x400, scoped, tag = 'output window, operand 1, single buffered']
    #allocation9 [shape = 's32[1]{0}', space=sflag, size = 0x4, scoped, tag = 'scoped memory for tpu_custom_call.1']
    #allocation10 [shape = 'u8[1024]{0}', space=vmem, size = 0x400, scoped, tag = 'output window, operand 2, single buffered']
    %10 = vsyncpa [#allocation3], 0
    %11 = vsyncpa [#allocation6], 0
    %12 = vsyncpa [#allocation4], 0
    %13 = vsyncpa [#allocation9], 0
    // Predicated region
    $region2: #{tpu_custom_call.1} parent=1 // pred_check
      _
    $region3: #{tpu_custom_call.1} parent=1 // pred_check_branch
      %15 = sbr.rel (0) target = $region5
    $region4: #{tpu_custom_call.1} parent=1 // pred_region
      %s16 = sadd.s32 0, 0
      %p17 = scmp.lt.s32.totalorder %s16, 0
      %s18 = scalar_select %p17, %s16, 0
      %s19 = smul.u32 2, %s18
      %21 = vsyncadd [#allocation3], 0
      %s22 = smul.addr %s19, 4
      %s23 = scalar_lea.hbm %s0, %s22
      %s24 = sshll.u32 %s23, 4
      %s25 = int_to_ptr.hbm [resolvable:$true] %s24
      %s26 = sshll.u32 [#allocation2], 4
      %s27 = int_to_ptr.vmem [resolvable:$true] %s26
      %32 = dma.hbm_to_vmem [thread:$0]  %s25, 256, %s27, [#allocation3], 128, 128, 8
    $region5: #{tpu_custom_call.1} parent=1 // pred_fallthru
      _
    // Predicated region
    $region6: #{tpu_custom_call.1} parent=1 // pred_check
      _
    $region7: #{tpu_custom_call.1} parent=1 // pred_check_branch
      %34 = sbr.rel (0) target = $region9
    $region8: #{tpu_custom_call.1} parent=1 // pred_region
      %s35 = sadd.s32 0, 0
      %p36 = scmp.lt.s32.totalorder %s35, 0
      %s37 = scalar_select %p36, %s35, 0
      %s38 = smul.u32 2, %s37
      %40 = vsyncadd [#allocation6], 0
      %s41 = smul.addr %s38, 2
      %s42 = scalar_lea.hbm %s1, %s41
      %s44 = sshll.u32 %s42, 4
      %s45 = int_to_ptr.hbm [resolvable:$true] %s44
      %s46 = sshll.u32 [#allocation5], 4
      %s47 = int_to_ptr.vmem [resolvable:$true] %s46
      %49 = dma.hbm_to_vmem [thread:$0]  %s45, 64, %s47, [#allocation6]
    $region9: #{tpu_custom_call.1} parent=1 // pred_fallthru
      _
    // Predicated region
    $region10: #{tpu_custom_call.1} parent=1 // pred_check
      _
    $region11: #{tpu_custom_call.1} parent=1 // pred_check_branch
      %51 = sbr.rel (0) target = $region13
    $region12: #{tpu_custom_call.1} parent=1 // pred_region
      %53 = dma.done [#allocation3], 256
    $region13: #{tpu_custom_call.1} parent=1 // pred_fallthru
      _
    // Predicated region
    $region14: #{tpu_custom_call.1} parent=1 // pred_check
      _
    $region15: #{tpu_custom_call.1} parent=1 // pred_check_branch
      %55 = sbr.rel (0) target = $region17
    $region16: #{tpu_custom_call.1} parent=1 // pred_region
      %57 = dma.done [#allocation6], 64
    $region17: #{tpu_custom_call.1} parent=1 // pred_fallthru
      _
    %s58 = sadd.s32 0, 0
    %p59 = scmp.lt.s32.totalorder %s58, 0
    %s60 = scalar_select %p59, %s58, 0
    %s61 = smul.u32 2, %s60
    %s62 = sadd.s32 0, 0
    %p63 = scmp.lt.s32.totalorder %s62, 0
    %s64 = scalar_select %p63, %s62, 0
    %s65 = smul.u32 2, %s64
    %p66 = scmp.eq.s32.totalorder 0, 0
    // Predicated region
    $region18: #{tpu_custom_call.1} parent=1 // pred_check
      %p67 = pneg %p66
    $region19: #{tpu_custom_call.1} parent=1 // pred_check_branch
      %69 = sbr.rel (%p67) target = $region21
    $region20: #{tpu_custom_call.1} parent=1 // pred_region
      %vm70 = vcmask 9216
      %71 = vst.msk [vmem:[#allocation7] sm:$0x3] %vm70, 0.0
      %72 = vst.msk [vmem:[#allocation8] sm:$0x3] %vm70, 0.0
      %73 = vst.msk [vmem:[#allocation10] sm:$0x3] %vm70, 0.0
    $region21: #{tpu_custom_call.1} parent=1 // pred_fallthru
      _
    %v74 = vld [vmem:[#allocation5] sm:$0xf]
    %v75 = vld [vmem:[#allocation2] ss:$4 sm:$0x3]
    %s76 = scalar_lea.vmem [#allocation2], 8
    %v77 = vld [vmem:[%s76] ss:$4 sm:$0x3]
    %s78 = scalar_lea.vmem [#allocation2], 1
    %v79 = vld [vmem:[%s78] ss:$4 sm:$0x3]
    %s80 = scalar_lea.vmem [#allocation2], 9
    %v81 = vld [vmem:[%s80] ss:$4 sm:$0x3]
    %v82 = vsub.f32 %v75, %v79
    %v83 = vsub.f32 %v77, %v81
    %v84 = vmax.f32 %v82, 0.0
    %v85 = vmax.f32 %v83, 0.0
    %v86 = vand.u32 2147483647, %v82
    %v87 = vand.u32 2147483647, %v83
    %v88 = vsub.f32 0.0, %v86
    %v89 = vsub.f32 0.0, %v87
    %v90 = vmul.f32 %v88, 1.442695
    %v91 = vpow.pop %v90
    %v92 = vmul.f32 %v89, 1.442695
    %v93 = vpow.pop %v92
    %v94 = vadd.f32 %v91, 1.0
    %v95 = vadd.f32 %v93, 1.0
    %v96 = vlog2.pop %v94
    %v97 = vmul.f32 %v96, 0.6931472
    %v98 = vlog2.pop %v95
    %v99 = vmul.f32 %v98, 0.6931472
    %v100 = vadd.f32 %v84, %v97
    %v101 = vadd.f32 %v85, %v99
    %v102 = vsub.f32 %v100, %v82
    %v103 = vsub.f32 %v101, %v83
    %vm104 = vcmp.gt.f32.partialorder %v74, 0.0
    %vm105 = vmxor %vm104, 1
    %v106 = vld [vmem:[#allocation7] sm:$0x3]
    %109 = vst [vmem:[#allocation1] ss:$2 sm:$0xff] %v100
    %s110 = scalar_lea.vmem [#allocation1], 1
    %111 = vst [vmem:[%s110] ss:$2 sm:$0xff] %v101
    %v112 = vld [vmem:[#allocation1] sm:$0xff]
    %v114 = vsel %vm104, %v112, 0.0
    %116 = vst [vmem:[#allocation1] ss:$4 sm:$0xff] %v114
    %v117 = vld.sshfl [vmem:[#allocation1] sm:$0xff pattern:$0x73625140]
    %v118 = vld.sshfl [vmem:[#allocation1 + $0x8] sm:$0xff pattern:$0x73625140]
    %vm121 = vcmask 1041408
    %v122 = vsel %vm121, %v117, 0.0
    %v123 = vsel %vm121, %v118, 0.0
    %v124 = vadd.f32 %v122, %v123
    %125 = vadd.xlane.f32.xlu0 %v124
    %v126 = vpop.xlane.xlu0 %125
    %v127 = vadd.f32 %v106, %v126
    %vm128 = vcmask 1024
    %129 = vst.msk [vmem:[#allocation7] sm:$0x3] %vm128, %v127
    %v130 = vld [vmem:[#allocation8] sm:$0x3]
    %133 = vst [vmem:[#allocation1] ss:$2 sm:$0xff] %v102
    %s134 = scalar_lea.vmem [#allocation1], 1
    %135 = vst [vmem:[%s134] ss:$2 sm:$0xff] %v103
    %v136 = vld [vmem:[#allocation1] sm:$0xff]
    %v138 = vsel %vm105, %v136, 0.0
    %140 = vst [vmem:[#allocation1] ss:$4 sm:$0xff] %v138
    %v141 = vld.sshfl [vmem:[#allocation1] sm:$0xff pattern:$0x73625140]
    %v142 = vld.sshfl [vmem:[#allocation1 + $0x8] sm:$0xff pattern:$0x73625140]
    %v145 = vsel %vm121, %v141, 0.0
    %v146 = vsel %vm121, %v142, 0.0
    %v147 = vadd.f32 %v145, %v146
    %148 = vadd.xlane.f32.xlu0 %v147
    %v149 = vpop.xlane.xlu0 %148
    %v150 = vadd.f32 %v130, %v149
    %151 = vst.msk [vmem:[#allocation8] sm:$0x3] %vm128, %v150
    %v152 = vld [vmem:[#allocation10] sm:$0x3]
    %v153 = vsel %vm104, 1, 0
    %v154 = vcvt.s32.f32 %v153
    %156 = vst [vmem:[#allocation1] ss:$4 sm:$0xff] %v154
    %v157 = vld.sshfl [vmem:[#allocation1] sm:$0xff pattern:$0x73625140]
    %v158 = vld.sshfl [vmem:[#allocation1 + $0x8] sm:$0xff pattern:$0x73625140]
    %v161 = vsel %vm121, %v157, 0.0
    %v162 = vsel %vm121, %v158, 0.0
    %v163 = vadd.f32 %v161, %v162
    %164 = vadd.xlane.f32.xlu0 %v163
    %v165 = vpop.xlane.xlu0 %164
    %v166 = vadd.f32 %v152, %v165
    %167 = vst.msk [vmem:[#allocation10] sm:$0x3] %vm128, %v166
    %s168 = scalar_lea.vmem [#allocation2], 2
    %v169 = vld [vmem:[%s168] ss:$4 sm:$0x3]
    %s170 = scalar_lea.vmem [#allocation2], 10
    %v171 = vld [vmem:[%s170] ss:$4 sm:$0x3]
    %s172 = scalar_lea.vmem [#allocation2], 3
    %v173 = vld [vmem:[%s172] ss:$4 sm:$0x3]
    %s174 = scalar_lea.vmem [#allocation2], 11
    %v175 = vld [vmem:[%s174] ss:$4 sm:$0x3]
    %v176 = vsub.f32 %v169, %v173
    %v177 = vsub.f32 %v171, %v175
    %v178 = vmax.f32 %v176, 0.0
    %v179 = vmax.f32 %v177, 0.0
    %v180 = vand.u32 2147483647, %v176
    %v181 = vand.u32 2147483647, %v177
    %v182 = vsub.f32 0.0, %v180
    %v183 = vsub.f32 0.0, %v181
    %v184 = vmul.f32 %v182, 1.442695
    %v185 = vpow.pop %v184
    %v186 = vmul.f32 %v183, 1.442695
    %v187 = vpow.pop %v186
    %v188 = vadd.f32 %v185, 1.0
    %v189 = vadd.f32 %v187, 1.0
    %v190 = vlog2.pop %v188
    %v191 = vmul.f32 %v190, 0.6931472
    %v192 = vlog2.pop %v189
    %v193 = vmul.f32 %v192, 0.6931472
    %v194 = vadd.f32 %v178, %v191
    %v195 = vadd.f32 %v179, %v193
    %v196 = vsub.f32 %v194, %v176
    %v197 = vsub.f32 %v195, %v177
    %vm198 = vcmp.gt.f32.partialorder %v74, 0.5
    %vm199 = vmxor %vm198, 1
    %v200 = vld [vmem:[#allocation7] sm:$0x3]
    %203 = vst [vmem:[#allocation1] ss:$2 sm:$0xff] %v194
    %s204 = scalar_lea.vmem [#allocation1], 1
    %205 = vst [vmem:[%s204] ss:$2 sm:$0xff] %v195
    %v206 = vld [vmem:[#allocation1] sm:$0xff]
    %v208 = vsel %vm198, %v206, 0.0
    %210 = vst [vmem:[#allocation1] ss:$4 sm:$0xff] %v208
    %v211 = vld.sshfl [vmem:[#allocation1] sm:$0xff pattern:$0x73625140]
    %v212 = vld.sshfl [vmem:[#allocation1 + $0x8] sm:$0xff pattern:$0x73625140]
    %v215 = vsel %vm121, %v211, 0.0
    %v216 = vsel %vm121, %v212, 0.0
    %v217 = vadd.f32 %v215, %v216
    %218 = vadd.xlane.f32.xlu0 %v217
    %v219 = vpop.xlane.xlu0 %218
    %v220 = vadd.f32 %v200, %v219
    %vm221 = vcmask 9224
    %222 = vst.msk [vmem:[#allocation7] sm:$0x3] %vm221, %v220
    %v223 = vld [vmem:[#allocation8] sm:$0x3]
    %226 = vst [vmem:[#allocation1] ss:$2 sm:$0xff] %v196
    %s227 = scalar_lea.vmem [#allocation1], 1
    %228 = vst [vmem:[%s227] ss:$2 sm:$0xff] %v197
    %v229 = vld [vmem:[#allocation1] sm:$0xff]
    %v231 = vsel %vm199, %v229, 0.0
    %233 = vst [vmem:[#allocation1] ss:$4 sm:$0xff] %v231
    %v234 = vld.sshfl [vmem:[#allocation1] sm:$0xff pattern:$0x73625140]
    %v235 = vld.sshfl [vmem:[#allocation1 + $0x8] sm:$0xff pattern:$0x73625140]
    %v238 = vsel %vm121, %v234, 0.0
    %v239 = vsel %vm121, %v235, 0.0
    %v240 = vadd.f32 %v238, %v239
    %241 = vadd.xlane.f32.xlu0 %v240
    %v242 = vpop.xlane.xlu0 %241
    %v243 = vadd.f32 %v223, %v242
    %244 = vst.msk [vmem:[#allocation8] sm:$0x3] %vm221, %v243
    %v245 = vld [vmem:[#allocation10] sm:$0x3]
    %v246 = vsel %vm198, 1, 0
    %v247 = vcvt.s32.f32 %v246
    %249 = vst [vmem:[#allocation1] ss:$4 sm:$0xff] %v247
    %v250 = vld.sshfl [vmem:[#allocation1] sm:$0xff pattern:$0x73625140]
    %v251 = vld.sshfl [vmem:[#allocation1 + $0x8] sm:$0xff pattern:$0x73625140]
    %v254 = vsel %vm121, %v250, 0.0
    %v255 = vsel %vm121, %v251, 0.0
    %v256 = vadd.f32 %v254, %v255
    %257 = vadd.xlane.f32.xlu0 %v256
    %v258 = vpop.xlane.xlu0 %257
    %v259 = vadd.f32 %v245, %v258
    %260 = vst.msk [vmem:[#allocation10] sm:$0x3] %vm221, %v259
    // Predicated region
    $region22: #{tpu_custom_call.1} parent=1 // pred_check
      _
    $region23: #{tpu_custom_call.1} parent=1 // pred_check_branch
      %262 = sbr.rel (0) target = $region25
    $region24: #{tpu_custom_call.1} parent=1 // pred_region
      %264 = vsyncadd [#allocation4], 0
      %s266 = sshll.u32 [#allocation7], 4
      %s267 = int_to_ptr.vmem [resolvable:$true] %s266
      %s268 = sshll.u32 %s2, 4
      %s269 = int_to_ptr.hbm [resolvable:$true] %s268
      %271 = dma.vmem_to_hbm [thread:$0]  %s267, 32, %s269, [#allocation4]
    $region25: #{tpu_custom_call.1} parent=1 // pred_fallthru
      _
    // Predicated region
    $region26: #{tpu_custom_call.1} parent=1 // pred_check
      _
    $region27: #{tpu_custom_call.1} parent=1 // pred_check_branch
      %273 = sbr.rel (0) target = $region29
    $region28: #{tpu_custom_call.1} parent=1 // pred_region
      %275 = vsyncadd [#allocation9], 0
      %s277 = sshll.u32 [#allocation8], 4
      %s278 = int_to_ptr.vmem [resolvable:$true] %s277
      %s279 = sshll.u32 %s3, 4
      %s280 = int_to_ptr.hbm [resolvable:$true] %s279
      %282 = dma.vmem_to_hbm [thread:$0]  %s278, 32, %s280, [#allocation9]
    $region29: #{tpu_custom_call.1} parent=1 // pred_fallthru
      _
    // Predicated region
    $region30: #{tpu_custom_call.1} parent=1 // pred_check
      _
    $region31: #{tpu_custom_call.1} parent=1 // pred_check_branch
      %284 = sbr.rel (0) target = $region33
    $region32: #{tpu_custom_call.1} parent=1 // pred_region
      %286 = vsyncadd [#allocation9], 0
      %s288 = sshll.u32 [#allocation10], 4
      %s289 = int_to_ptr.vmem [resolvable:$true] %s288
      %s290 = sshll.u32 %s4, 4
      %s291 = int_to_ptr.hbm [resolvable:$true] %s290
      %293 = dma.vmem_to_hbm [thread:$0]  %s289, 32, %s291, [#allocation9]
    $region33: #{tpu_custom_call.1} parent=1 // pred_fallthru
      _
    // Predicated region
    $region34: #{tpu_custom_call.1} parent=1 // pred_check
      _
    $region35: #{tpu_custom_call.1} parent=1 // pred_check_branch
      %295 = sbr.rel (0) target = $region37
    $region36: #{tpu_custom_call.1} parent=1 // pred_region
      %297 = dma.done [#allocation4], 32
    $region37: #{tpu_custom_call.1} parent=1 // pred_fallthru
      _
    // Predicated region
    $region38: #{tpu_custom_call.1} parent=1 // pred_check
      _
    $region39: #{tpu_custom_call.1} parent=1 // pred_check_branch
      %299 = sbr.rel (0) target = $region41
    $region40: #{tpu_custom_call.1} parent=1 // pred_region
      %301 = dma.done [#allocation9], 32
    $region41: #{tpu_custom_call.1} parent=1 // pred_fallthru
      _
    // Predicated region
    $region42: #{tpu_custom_call.1} parent=1 // pred_check
      _
    $region43: #{tpu_custom_call.1} parent=1 // pred_check_branch
      %303 = sbr.rel (0) target = $region45
    $region44: #{tpu_custom_call.1} parent=1 // pred_region
      %305 = dma.done [#allocation9], 32
    $region45: #{tpu_custom_call.1} parent=1 // pred_fallthru
      _
    %306 = vsyncpa [#allocation3], 1
    %307 = vsyncpa [#allocation6], 1
    %308 = vsyncpa [#allocation4], 1
    %309 = vsyncpa [#allocation9], 1

</llo_original>
